<compile_context>
chip_gen: v5e
topology: v5e:2x2
jax: 0.10.0
libtpu: 0.0.40
codegen_flags: <defaults>
</compile_context>

<pallas_src>
import functools
import math

import jax
import jax.numpy as jnp
from jax.experimental import pallas as pl
from jax.experimental.pallas import tpu as pltpu

_LANES = 128
# 8192 rows * 128 lanes * 4 B = 4 MiB per output block (padded VMEM layout),
# 8 MiB double-buffered: safe on v5e/v6e/v7x default scoped VMEM.
_MAX_TILE_ROWS = 8192


def _tile_rows(batch: int):
    """Pick (tile_rows, grid) for a (batch, d) row-replication output."""
    if batch <= _MAX_TILE_ROWS:
        return batch, (1,)
    # Split into an even number of blocks (>= 2) so v7x's two TensorCores can
    # each take half of the store/writeback work; round the block row count up
    # to a sublane multiple of 8 (f32).  No-op on v5e / v6e (single TC).
    n_blocks = pl.cdiv(batch, _MAX_TILE_ROWS)
    if n_blocks % 2:
        n_blocks += 1
    tile_b = ((pl.cdiv(batch, n_blocks) + 7) // 8) * 8
    return tile_b, (pl.cdiv(batch, tile_b),)


def _bingham_z_kernel(p_ref, o_ref, *, action_dim):
    # p_ref: (1, d) param padded with one trailing slot (value ignored).
    # o_ref: (tile_b, d) output block.
    # Fused prep: lane mask (VPU select) + exp (EUP) are free slots under a
    # store-bound body; then a single sublane broadcast + store.
    lane = jax.lax.broadcasted_iota(jnp.int32, p_ref.shape, dimension=1)
    row = jnp.where(lane < action_dim,
                    -jnp.exp(p_ref[...]),
                    jnp.zeros_like(p_ref[...]))
    o_ref[...] = jnp.broadcast_to(row, o_ref.shape)


def _repeat_row_kernel(p_ref, o_ref):
    # Plain VectorModule.forward(x): replicate the param row across the batch.
    o_ref[...] = jnp.broadcast_to(p_ref[...], o_ref.shape)


def _replicate(kernel, row2d: jax.Array, batch: int) -> jax.Array:
    """Run `kernel` to produce a (batch, d) array from a (1, d) input row."""
    d = row2d.shape[1]
    dtype = row2d.dtype
    itemsize = jnp.dtype(dtype).itemsize
    tile_b, grid = _tile_rows(batch)
    # Advisory: pure bandwidth op.  HBM layout pads the last dim to 128 lanes.
    out_bytes = batch * _LANES * itemsize
    return pl.pallas_call(
        kernel,
        out_shape=jax.ShapeDtypeStruct((batch, d), dtype),
        grid=grid,
        in_specs=[pl.BlockSpec((1, d), lambda i: (0, 0))],
        out_specs=pl.BlockSpec((tile_b, d), lambda i: (i, 0)),
        compiler_params=pltpu.CompilerParams(
            dimension_semantics=("parallel",)),
        cost_estimate=pl.CostEstimate(
            flops=0, transcendentals=d,
            bytes_accessed=out_bytes + d * itemsize),
    )(row2d)


def vector_module_forward(param: jax.Array, x: jax.Array | None = None) -> jax.Array:
    """VectorModule.forward: x is None -> param; else param repeated x.shape[0] times."""
    if x is None:
        return param
    return _replicate(_repeat_row_kernel, param.reshape(1, -1), x.shape[0])


def bingham_forward(param_Z: jax.Array, M: jax.Array):
    """Bingham.forward(M).

    param_Z: (action_dim,) — the _Z VectorModule parameter (log of -Z diagonal).
    M:       (B, 4, 4) matrices; only M.shape[0] is consumed by forward.
    Returns (M, Zcat) with Zcat[:, :action_dim] = -exp(param_Z), Zcat[:, -1] = 0.
    """
    batch = M.shape[0]
    action_dim = param_Z.shape[0]
    d = action_dim + 1
    # Single layout op: append one (ignored) slot so the kernel sees a (1, d)
    # tile.  -exp, zero column and batch replication are all inside the kernel.
    p_pad = jnp.pad(param_Z, (0, 1)).reshape(1, d)
    kernel = functools.partial(_bingham_z_kernel, action_dim=action_dim)
    zcat = _replicate(kernel, p_pad, batch)
    return M, zcat


if __name__ == "__main__":
    key = jax.random.PRNGKey(0)
    k_m, k_p, k_x = jax.random.split(key, 3)

    action_dim = 3
    batch = 2
    init_std = -50.0

    # Bingham.__init__: self._Z.set(math.log(-init_std)) fills the param with log(50).
    param = jnp.full((action_dim,), math.log(-init_std), dtype=jnp.float32)
    # M: batch of 4x4 matrices (only the leading dim is used by forward).
    M = jax.random.normal(k_m, (batch, 4, 4), dtype=jnp.float32)

    M_out, Zcat = bingham_forward(param, M)
    Zcat = jax.block_until_ready(Zcat)

    ref = jnp.concatenate(
        [jnp.broadcast_to((-jnp.exp(param))[None, :], (batch, action_dim)),
         jnp.zeros((batch, 1), dtype=jnp.float32)], axis=1)
    assert M_out.shape == M.shape and bool(jnp.allclose(M_out, M))
    assert Zcat.shape == (batch, action_dim + 1), Zcat.shape
    assert Zcat.dtype == param.dtype
    assert bool(jnp.allclose(Zcat, ref)), "Bingham forward mismatch"

    # Second check: random parameter and an odd batch (exercises ragged tiling).
    param2 = jax.random.normal(k_p, (action_dim,), dtype=jnp.float32)
    batch2 = 37
    M2 = jax.random.normal(k_x, (batch2, 4, 4), dtype=jnp.float32)
    _, Zcat2 = bingham_forward(param2, M2)
    Zcat2 = jax.block_until_ready(Zcat2)
    ref2 = jnp.concatenate(
        [jnp.broadcast_to((-jnp.exp(param2))[None, :], (batch2, action_dim)),
         jnp.zeros((batch2, 1), dtype=jnp.float32)], axis=1)
    assert bool(jnp.allclose(Zcat2, ref2)), "Bingham forward mismatch (batch=37)"

    # Dependent VectorModule on its own (d = 3, direct one-pass output).
    vm = jax.block_until_ready(vector_module_forward(param2, M2[:, :, -1]))
    assert vm.shape == (batch2, action_dim)
    assert bool(jnp.allclose(vm, jnp.broadcast_to(param2[None, :], (batch2, action_dim))))
    assert vector_module_forward(param2, None).shape == (action_dim,)

    print("KERNEL_OK")
</pallas_src>

<mosaic_0001>
module attributes {stable_mosaic.version = 11 : i64} {
  func.func @_bingham_z_kernel(%arg0: i32, %arg1: memref<1x4xf32, #tpu.memory_space<vmem>>, %arg2: memref<2x4xf32, #tpu.memory_space<vmem>>) attributes {dimension_semantics = [#tpu.dimension_semantics<parallel>], iteration_bounds = array<i64: 1>, scalar_prefetch = 0 : i64, scratch_operands = 0 : i64, tpu.core_type = #tpu.core_type<tc>, window_params = [{pipeline_mode = #tpu.pipeline_mode<synchronous>, transform_indices = @transform_0, window_bounds = array<i64: 1, 4>}, {transform_indices = @transform_1, window_bounds = array<i64: 2, 4>}]} {
    %0 = tpu.iota {dimensions = array<i32: 1>} : vector<1x4xi32>
    %c3_i32 = arith.constant 3 : i32
    %1 = vector.broadcast %c3_i32 : i32 to vector<1x4xi32>
    %2 = arith.cmpi slt, %0, %1 : vector<1x4xi32>
    %c0 = arith.constant 0 : index
    %c0_0 = arith.constant 0 : index
    %3 = vector.load %arg1[%c0, %c0_0] : memref<1x4xf32, #tpu.memory_space<vmem>>, vector<1x4xf32>
    %4 = math.exp %3 : vector<1x4xf32>
    %cst = arith.constant 0.000000e+00 : f32
    %5 = vector.broadcast %cst : f32 to vector<1x4xf32>
    %6 = arith.subf %5, %4 : vector<1x4xf32>
    %cst_1 = arith.constant 0.000000e+00 : f32
    %7 = vector.broadcast %cst_1 : f32 to vector<1x4xf32>
    %8 = arith.select %2, %6, %7 : vector<1x4xi1>, vector<1x4xf32>
    %9 = vector.shape_cast %8 : vector<1x4xf32> to vector<1x4xf32>
    %10 = vector.broadcast %9 : vector<1x4xf32> to vector<2x4xf32>
    %c0_2 = arith.constant 0 : index
    %c0_3 = arith.constant 0 : index
    %11 = vector.load %arg2[%c0_2, %c0_3] : memref<2x4xf32, #tpu.memory_space<vmem>>, vector<2x4xf32>
    tpu.vector_store %arg2[%c0_2, %c0_3], %10 {strides = array<i32>} : memref<2x4xf32, #tpu.memory_space<vmem>>, vector<2x4xf32>,
    return
  }
  func.func @transform_0(%arg0: i32) -> (i32, i32) {
    %c0_i32 = arith.constant 0 : i32
    %c0_i32_0 = arith.constant 0 : i32
    %c0_i32_1 = arith.constant 0 : i32
    return %c0_i32, %c0_i32_0 : i32, i32
  }
  func.func @transform_1(%arg0: i32) -> (i32, i32) {
    %c0_i32 = arith.constant 0 : i32
    %c0_i32_0 = arith.constant 0 : i32
    return %arg0, %c0_i32 : i32, i32
  }
}

</mosaic_0001>

<llo_original>
// kernel: tpu_custom_call.1
$region0: #{tpu_custom_call.1}
  #allocation0 [shape = 'u32[]', space=smem, size = 0x4, offset = 0x4, fixed_abs, tag = 'smem constant byte address 0x4 - core index']
  #allocation1 [shape = 'u32[72,128]{1,0:T(1,128)}', space=vmem, size = 0x9000, scoped, tag = 'internal scratch']
  %s0 = inlined_call_operand.hbm [shape: f32[1,4], index: 0, kind: input, shape index: {}]
  %s1 = inlined_call_operand.hbm [shape: f32[2,4], index: 1, kind: output, shape index: {}]
  %s2 = sld [smem:[#allocation0]]
  $region18: #{tpu_custom_call.1} parent=0
    _
  %s4 = ssub.s32 1, %s2
  %s5 = scalar_select 0, %s4, %s2
  $region1: #{tpu_custom_call.1} parent=0
    #allocation2 [shape = 'u8[512]{0}', space=vmem, size = 0x400, scoped, tag = 'input window, operand 0, single buffered']
    #allocation3 [shape = 's32[1]{0}', space=sflag, size = 0x4, scoped, tag = 'scoped memory for tpu_custom_call.1']
    #allocation4 [shape = 's32[1]{0}', space=sflag, size = 0x4, scoped, tag = 'scoped memory for tpu_custom_call.1']
    #allocation5 [shape = 'u8[1024]{0}', space=vmem, size = 0x400, scoped, tag = 'output window, operand 0, single buffered']
    %6 = vsyncpa [#allocation3], 0
    %7 = vsyncpa [#allocation4], 0
    // Predicated region
    $region2: #{tpu_custom_call.1} parent=1 // pred_check
      _
    $region3: #{tpu_custom_call.1} parent=1 // pred_check_branch
      %9 = sbr.rel (0) target = $region5
    $region4: #{tpu_custom_call.1} parent=1 // pred_region
      %11 = vsyncadd [#allocation3], 0
      %s13 = sshll.u32 %s0, 4
      %s14 = int_to_ptr.hbm [resolvable:$true] %s13
      %s15 = sshll.u32 [#allocation2], 4
      %s16 = int_to_ptr.vmem [resolvable:$true] %s15
      %18 = dma.hbm_to_vmem [thread:$0]  %s14, 16, %s16, [#allocation3]
    $region5: #{tpu_custom_call.1} parent=1 // pred_fallthru
      _
    // Predicated region
    $region6: #{tpu_custom_call.1} parent=1 // pred_check
      _
    $region7: #{tpu_custom_call.1} parent=1 // pred_check_branch
      %20 = sbr.rel (0) target = $region9
    $region8: #{tpu_custom_call.1} parent=1 // pred_region
      %22 = dma.done [#allocation3], 16
    $region9: #{tpu_custom_call.1} parent=1 // pred_fallthru
      _
    %v23 = vlaneseq
    %v24 = vand.u32 %v23, 127
    %vm25 = vcmp.lt.s32.totalorder %v24, 3
    %v26 = vld [vmem:[#allocation2] sm:$0x1]
    %v27 = vmul.f32 %v26, 1.442695
    %v28 = vpow.pop %v27
    %v29 = vsub.f32 0.0, %v28
    %v30 = vsel %vm25, %v29, 0.0
    %v31 = vperm.slane %v30, 0
    %vm32 = vcmask 25600
    %33 = vst.msk [vmem:[#allocation5] sm:$0x3] %vm32, %v31
    // Predicated region
    $region10: #{tpu_custom_call.1} parent=1 // pred_check
      _
    $region11: #{tpu_custom_call.1} parent=1 // pred_check_branch
      %35 = sbr.rel (0) target = $region13
    $region12: #{tpu_custom_call.1} parent=1 // pred_region
      %37 = vsyncadd [#allocation4], 0
      %s39 = sshll.u32 [#allocation5], 4
      %s40 = int_to_ptr.vmem [resolvable:$true] %s39
      %s41 = sshll.u32 %s1, 4
      %s42 = int_to_ptr.hbm [resolvable:$true] %s41
      %44 = dma.vmem_to_hbm [thread:$0]  %s40, 32, %s42, [#allocation4]
    $region13: #{tpu_custom_call.1} parent=1 // pred_fallthru
      _
    // Predicated region
    $region14: #{tpu_custom_call.1} parent=1 // pred_check
      _
    $region15: #{tpu_custom_call.1} parent=1 // pred_check_branch
      %46 = sbr.rel (0) target = $region17
    $region16: #{tpu_custom_call.1} parent=1 // pred_region
      %48 = dma.done [#allocation4], 32
    $region17: #{tpu_custom_call.1} parent=1 // pred_fallthru
      _
    %49 = vsyncpa [#allocation3], 1
    %50 = vsyncpa [#allocation4], 1

</llo_original>
